<compile_context>
chip_gen: v7x
topology: tpu7x:2x2x1
jax: 0.10.0
libtpu: 0.0.40
codegen_flags: <defaults>
</compile_context>

<pallas_src>
import functools

import jax
import jax.numpy as jnp
from jax.experimental import pallas as pl
from jax.experimental.pallas import tpu as pltpu


def _round_up(x, m):
    return ((x + m - 1) // m) * m


# -----------------------------------------------------------------------------
# Fast path: 128 % num_dim == 0  ->  interleaved, lane-dense output layout.
# -----------------------------------------------------------------------------
def _time2vec_interleaved_kernel(t_ref, e_ref, freq_ref, phase_ref, mask_ref,
                                 o_ref):
    """One grid step: TR output rows of the row-major (N, num_dim) encoding.

    t_ref:     (TR, G)    time values; G = 128 // num_dim times per output row
    e_ref:     (G, 128)   bf16 0/1 expansion matrix, E[j, l] = (l // D == j)
    freq_ref:  (1, 128)   freq[(l % D) - 1]   (0 where l % D == 0)
    phase_ref: (1, 128)   phase[(l % D) - 1]  (0 where l % D == 0)
    mask_ref:  (1, 128)   1.0 where l % D == 0 (identity slot), else 0.0
    o_ref:     (TR, 128)  interleaved output: lane l of row r holds
                          dim (l % D) of time (r * G + l // D)
    """
    t = t_ref[...]                                    # (TR, G) f32
    e = e_ref[...]                                    # (G, 128) bf16 (0/1)

    # Replicate each time value across its num_dim adjacent lanes using the
    # idle MXU.  The 0/1 matrix is exact in bf16; the time values are fed as
    # an error-free 3-way bf16 split (p0+p1+p2 == t exactly), so t_rep
    # reconstructs t bit-exactly in f32 independent of MXU operand precision.
    p0 = t.astype(jnp.bfloat16)
    r1 = t - p0.astype(jnp.float32)
    p1 = r1.astype(jnp.bfloat16)
    p2 = (r1 - p1.astype(jnp.float32)).astype(jnp.bfloat16)
    t_rep = jnp.dot(p0, e, preferred_element_type=jnp.float32)
    t_rep = t_rep + jnp.dot(p1, e, preferred_element_type=jnp.float32)
    t_rep = t_rep + jnp.dot(p2, e, preferred_element_type=jnp.float32)

    # VPU broadcast multiply/add + EUP sin, then one unmasked full-tile store.
    z = jnp.sin(t_rep * freq_ref[...] + phase_ref[...])
    o_ref[...] = jnp.where(mask_ref[...] != 0.0, t_rep, z).astype(o_ref.dtype)


def _time2vec_interleaved(t_flat, freq, phase, num_dim, tile_rows):
    n = t_flat.shape[0]
    d = num_dim
    g = 128 // d                        # time positions per 128-lane output row

    # Pad only to a multiple of g (< 128 elements); aligned sizes copy nothing.
    n_pad = _round_up(n, g)
    if n_pad != n:
        t_flat = jnp.pad(t_flat, (0, n_pad - n))
    rows = n_pad // g
    t2 = t_flat.reshape(rows, g)        # free reshape; contiguous HBM reads

    # Per-lane constants (lane l -> dim l % d); fetched once (constant index).
    lane = jnp.arange(128, dtype=jnp.int32)
    dim = lane % d
    freq_ext = jnp.concatenate(
        [jnp.zeros((1,), jnp.float32), freq.astype(jnp.float32)])
    phase_ext = jnp.concatenate(
        [jnp.zeros((1,), jnp.float32), phase.astype(jnp.float32)])
    freq_row = freq_ext[dim][None, :]                            # (1, 128)
    phase_row = phase_ext[dim][None, :]                          # (1, 128)
    mask_row = (dim == 0).astype(jnp.float32)[None, :]           # (1, 128)
    expand = (lane[None, :] // d ==
              jnp.arange(g, dtype=jnp.int32)[:, None]).astype(jnp.bfloat16)

    # Tile = tr output rows => tr*128*4 B of output per step (independent of
    # num_dim).  Default 1024 rows = 512 KiB/step: near HBM roofline, ~2 MiB
    # of double-buffered VMEM, multi-step grids for mid-size inputs.
    tr = min(tile_rows, rows)
    grid = (pl.cdiv(rows, tr),)         # ragged last block handled by Pallas

    out = pl.pallas_call(
        _time2vec_interleaved_kernel,
        out_shape=jax.ShapeDtypeStruct((rows, 128), jnp.float32),
        grid_spec=pltpu.PrefetchScalarGridSpec(
            num_scalar_prefetch=0,
            grid=grid,
            in_specs=[
                pl.BlockSpec((tr, g), lambda i: (i, 0)),
                pl.BlockSpec((g, 128), lambda i: (0, 0)),
                pl.BlockSpec((1, 128), lambda i: (0, 0)),
                pl.BlockSpec((1, 128), lambda i: (0, 0)),
                pl.BlockSpec((1, 128), lambda i: (0, 0)),
            ],
            out_specs=pl.BlockSpec((tr, 128), lambda i: (i, 0)),
        ),
        compiler_params=pltpu.CompilerParams(
            # Shards grid steps across both v7x TensorCores (no-op on v5e/v6e).
            dimension_semantics=("parallel",),
            vmem_limit_bytes=32 * 1024 * 1024,
        ),
    )(t2, expand, freq_row, phase_row, mask_row)

    # (rows, 128) row-major IS the flat (n_pad, num_dim) encoding: free reshape.
    enc = out.reshape(rows * g, d)
    if n_pad != n:
        enc = enc[:n]                   # slice copy only for misaligned sizes
    return enc


# -----------------------------------------------------------------------------
# Fallback for num_dim that does not divide 128: transposed (num_dim, N) output
# tile + wrapper transpose.
# -----------------------------------------------------------------------------
def _time2vec_transposed_kernel(t_ref, freq_ref, phase_ref, o_ref):
    t = t_ref[...]                                    # (1, TILE) lane-dense
    o_ref[0:1, :] = t.astype(o_ref.dtype)
    o_ref[1:, :] = jnp.sin(t * freq_ref[...] + phase_ref[...]).astype(o_ref.dtype)


def _time2vec_transposed(t_flat, freq, phase, num_dim, tile_rows):
    # TODO(synk): this path pays one extra HBM pass for the wrapper transpose;
    # only taken when num_dim does not divide 128.
    n = t_flat.shape[0]
    k = num_dim - 1
    n_pad = _round_up(n, 128)
    if n_pad != n:
        t_flat = jnp.pad(t_flat, (0, n_pad - n))
    tile = min(tile_rows * 16, n_pad)   # multiple of 128
    t_row = t_flat.reshape(1, n_pad)
    freq_col = freq.reshape(k, 1).astype(jnp.float32)
    phase_col = phase.reshape(k, 1).astype(jnp.float32)
    out_t = pl.pallas_call(
        _time2vec_transposed_kernel,
        out_shape=jax.ShapeDtypeStruct((num_dim, n_pad), jnp.float32),
        grid_spec=pltpu.PrefetchScalarGridSpec(
            num_scalar_prefetch=0,
            grid=(pl.cdiv(n_pad, tile),),
            in_specs=[
                pl.BlockSpec((1, tile), lambda i: (0, i)),
                pl.BlockSpec((k, 1), lambda i: (0, 0)),
                pl.BlockSpec((k, 1), lambda i: (0, 0)),
            ],
            out_specs=pl.BlockSpec((num_dim, tile), lambda i: (0, i)),
        ),
        compiler_params=pltpu.CompilerParams(
            dimension_semantics=("parallel",),
            vmem_limit_bytes=32 * 1024 * 1024,
        ),
    )(t_row, freq_col, phase_col)
    return out_t[:, :n].T


# -----------------------------------------------------------------------------
# Public wrapper: Time2Vec.forward, signature (...,) -> (..., num_dim).
# -----------------------------------------------------------------------------
@functools.partial(jax.jit, static_argnames=("num_dim", "tile_rows"))
def time2vec_forward(t, freq, phase, *, num_dim, tile_rows=1024):
    """out[..., 0] = t ; out[..., k] = sin(t * freq[k-1] + phase[k-1])."""
    assert freq.shape == (num_dim - 1,), freq.shape
    assert phase.shape == (num_dim - 1,), phase.shape

    orig_shape = t.shape
    t_flat = t.reshape(-1).astype(jnp.float32)

    if num_dim == 1:
        # Degenerate: encoding is just t itself.
        return t_flat.reshape(*orig_shape, 1)

    if 128 % num_dim == 0:
        enc = _time2vec_interleaved(t_flat, freq, phase, num_dim, tile_rows)
    else:
        enc = _time2vec_transposed(t_flat, freq, phase, num_dim, tile_rows)

    return enc.reshape(*orig_shape, num_dim)


if __name__ == "__main__":
    num_dim = 8

    key = jax.random.PRNGKey(0)
    k_t, k_freq, k_phase = jax.random.split(key, 3)

    # Parameters (matching nn.Parameter(torch.randn(num_dim - 1))).
    freq = jax.random.normal(k_freq, (num_dim - 1,), dtype=jnp.float32)
    phase = jax.random.normal(k_phase, (num_dim - 1,), dtype=jnp.float32)

    # Example input: arbitrary leading shape, e.g. (batch=2, channels=4, seq=16).
    t = jax.random.normal(k_t, (2, 4, 16), dtype=jnp.float32)

    out = time2vec_forward(t, freq, phase, num_dim=num_dim)
    out = jax.block_until_ready(out)

    # Pure-JAX reference for correctness.
    ref = jnp.concatenate(
        [t[..., None], jnp.sin(t[..., None] * freq + phase)], axis=-1
    )
    assert out.shape == (2, 4, 16, num_dim), out.shape
    assert jnp.allclose(out, ref, atol=1e-5, rtol=1e-5), float(
        jnp.max(jnp.abs(out - ref))
    )

    print("KERNEL_OK")
</pallas_src>

<mosaic_0001>
module attributes {stable_mosaic.version = 11 : i64} {
  func.func @_time2vec_interleaved_kernel(%arg0: i32, %arg1: memref<8x16xf32, #tpu.memory_space<vmem>>, %arg2: memref<16x128xbf16, #tpu.memory_space<vmem>>, %arg3: memref<1x128xf32, #tpu.memory_space<vmem>>, %arg4: memref<1x128xf32, #tpu.memory_space<vmem>>, %arg5: memref<1x128xf32, #tpu.memory_space<vmem>>, %arg6: memref<8x128xf32, #tpu.memory_space<vmem>>) attributes {dimension_semantics = [#tpu.dimension_semantics<parallel>], iteration_bounds = array<i64: 1>, scalar_prefetch = 0 : i64, scratch_operands = 0 : i64, tpu.core_type = #tpu.core_type<tc>, window_params = [{transform_indices = @transform_0, window_bounds = array<i64: 8, 16>}, {pipeline_mode = #tpu.pipeline_mode<synchronous>, transform_indices = @transform_1, window_bounds = array<i64: 16, 128>}, {pipeline_mode = #tpu.pipeline_mode<synchronous>, transform_indices = @transform_2, window_bounds = array<i64: 1, 128>}, {pipeline_mode = #tpu.pipeline_mode<synchronous>, transform_indices = @transform_3, window_bounds = array<i64: 1, 128>}, {pipeline_mode = #tpu.pipeline_mode<synchronous>, transform_indices = @transform_4, window_bounds = array<i64: 1, 128>}, {transform_indices = @transform_5, window_bounds = array<i64: 8, 128>}]} {
    %c0 = arith.constant 0 : index
    %c0_0 = arith.constant 0 : index
    %0 = vector.load %arg1[%c0, %c0_0] : memref<8x16xf32, #tpu.memory_space<vmem>>, vector<8x16xf32>
    %c0_1 = arith.constant 0 : index
    %c0_2 = arith.constant 0 : index
    %1 = vector.load %arg2[%c0_1, %c0_2] : memref<16x128xbf16, #tpu.memory_space<vmem>>, vector<16x128xbf16>
    %2 = arith.truncf %0 : vector<8x16xf32> to vector<8x16xbf16>
    %3 = arith.extf %2 : vector<8x16xbf16> to vector<8x16xf32>
    %4 = arith.subf %0, %3 : vector<8x16xf32>
    %5 = arith.truncf %4 : vector<8x16xf32> to vector<8x16xbf16>
    %6 = arith.extf %5 : vector<8x16xbf16> to vector<8x16xf32>
    %7 = arith.subf %4, %6 : vector<8x16xf32>
    %8 = arith.truncf %7 : vector<8x16xf32> to vector<8x16xbf16>
    %cst = arith.constant dense<0.000000e+00> : vector<8x128xf32>
    %9 = tpu.matmul %2, %1, %cst {dimension_numbers = #tpu.dot_dimension_numbers<[1], [0], [0], [1], [0, 0, 1, 1], [], []>} : vector<8x16xbf16>, vector<16x128xbf16>, vector<8x128xf32> -> vector<8x128xf32>
    %cst_3 = arith.constant dense<0.000000e+00> : vector<8x128xf32>
    %10 = tpu.matmul %5, %1, %cst_3 {dimension_numbers = #tpu.dot_dimension_numbers<[1], [0], [0], [1], [0, 0, 1, 1], [], []>} : vector<8x16xbf16>, vector<16x128xbf16>, vector<8x128xf32> -> vector<8x128xf32>
    %11 = arith.addf %9, %10 : vector<8x128xf32>
    %cst_4 = arith.constant dense<0.000000e+00> : vector<8x128xf32>
    %12 = tpu.matmul %8, %1, %cst_4 {dimension_numbers = #tpu.dot_dimension_numbers<[1], [0], [0], [1], [0, 0, 1, 1], [], []>} : vector<8x16xbf16>, vector<16x128xbf16>, vector<8x128xf32> -> vector<8x128xf32>
    %13 = arith.addf %11, %12 : vector<8x128xf32>
    %c0_5 = arith.constant 0 : index
    %c0_6 = arith.constant 0 : index
    %14 = vector.load %arg3[%c0_5, %c0_6] : memref<1x128xf32, #tpu.memory_space<vmem>>, vector<1x128xf32>
    %15 = vector.broadcast %14 : vector<1x128xf32> to vector<8x128xf32>
    %16 = arith.mulf %13, %15 : vector<8x128xf32>
    %c0_7 = arith.constant 0 : index
    %c0_8 = arith.constant 0 : index
    %17 = vector.load %arg4[%c0_7, %c0_8] : memref<1x128xf32, #tpu.memory_space<vmem>>, vector<1x128xf32>
    %18 = vector.broadcast %17 : vector<1x128xf32> to vector<8x128xf32>
    %19 = arith.addf %16, %18 : vector<8x128xf32>
    %20 = math.sin %19 : vector<8x128xf32>
    %c0_9 = arith.constant 0 : index
    %c0_10 = arith.constant 0 : index
    %21 = vector.load %arg5[%c0_9, %c0_10] : memref<1x128xf32, #tpu.memory_space<vmem>>, vector<1x128xf32>
    %cst_11 = arith.constant 0.000000e+00 : f32
    %22 = vector.broadcast %cst_11 : f32 to vector<1x128xf32>
    %23 = arith.cmpf one, %21, %22 : vector<1x128xf32>
    %24 = vector.shape_cast %23 : vector<1x128xi1> to vector<1x128xi1>
    %25 = vector.broadcast %24 : vector<1x128xi1> to vector<8x128xi1>
    %26 = arith.select %25, %13, %20 : vector<8x128xi1>, vector<8x128xf32>
    %c0_12 = arith.constant 0 : index
    %c0_13 = arith.constant 0 : index
    %27 = vector.load %arg6[%c0_12, %c0_13] : memref<8x128xf32, #tpu.memory_space<vmem>>, vector<8x128xf32>
    tpu.vector_store %arg6[%c0_12, %c0_13], %26 {strides = array<i32>} : memref<8x128xf32, #tpu.memory_space<vmem>>, vector<8x128xf32>,
    return
  }
  func.func @transform_0(%arg0: i32) -> (i32, i32) {
    %c0_i32 = arith.constant 0 : i32
    %c0_i32_0 = arith.constant 0 : i32
    return %arg0, %c0_i32 : i32, i32
  }
  func.func @transform_1(%arg0: i32) -> (i32, i32) {
    %c0_i32 = arith.constant 0 : i32
    %c0_i32_0 = arith.constant 0 : i32
    %c0_i32_1 = arith.constant 0 : i32
    return %c0_i32, %c0_i32_0 : i32, i32
  }
  func.func @transform_2(%arg0: i32) -> (i32, i32) {
    %c0_i32 = arith.constant 0 : i32
    %c0_i32_0 = arith.constant 0 : i32
    %c0_i32_1 = arith.constant 0 : i32
    return %c0_i32, %c0_i32_0 : i32, i32
  }
  func.func @transform_3(%arg0: i32) -> (i32, i32) {
    %c0_i32 = arith.constant 0 : i32
    %c0_i32_0 = arith.constant 0 : i32
    %c0_i32_1 = arith.constant 0 : i32
    return %c0_i32, %c0_i32_0 : i32, i32
  }
  func.func @transform_4(%arg0: i32) -> (i32, i32) {
    %c0_i32 = arith.constant 0 : i32
    %c0_i32_0 = arith.constant 0 : i32
    %c0_i32_1 = arith.constant 0 : i32
    return %c0_i32, %c0_i32_0 : i32, i32
  }
  func.func @transform_5(%arg0: i32) -> (i32, i32) {
    %c0_i32 = arith.constant 0 : i32
    %c0_i32_0 = arith.constant 0 : i32
    return %arg0, %c0_i32 : i32, i32
  }
}

</mosaic_0001>

<llo_original>
// kernel: time2vec_forward.1
$region0: #{time2vec_forward.1}
  #allocation0 [shape = 'u32[]', space=smem, size = 0x4, offset = 0x4, fixed_abs, tag = 'smem constant byte address 0x4 - core index']
  #allocation1 [shape = 'u32[144,128]{1,0:T(1,128)}', space=vmem, size = 0x12000, scoped, tag = 'internal scratch']
  %s0 = inlined_call_operand.vmem [shape: f32[8,16], index: 0, kind: input, shape index: {}]
  %s1 = inlined_call_operand.vmem [shape: bf16[16,128], index: 1, kind: input, shape index: {}]
  %s2 = inlined_call_operand.vmem [shape: f32[1,128], index: 2, kind: input, shape index: {}]
  %s3 = inlined_call_operand.vmem [shape: f32[1,128], index: 3, kind: input, shape index: {}]
  %s4 = inlined_call_operand.vmem [shape: f32[1,128], index: 4, kind: input, shape index: {}]
  %s5 = inlined_call_operand.vmem [shape: f32[8,128], index: 5, kind: output, shape index: {}]
  %s6 = sld [smem:[#allocation0]]
  $region30: #{time2vec_forward.1} parent=0
    _
  %s8 = ssub.s32 1, %s6
  %s9 = scalar_select 0, %s8, %s6
  // Predicated region
  $region2: #{time2vec_forward.1} parent=0 // pred_check
    _
  $region3: #{time2vec_forward.1} parent=0 // pred_check_branch
    %11 = sbr.rel (0) target = $region5
  $region4: #{time2vec_forward.1} parent=0 // pred_region
    _
  $region5: #{time2vec_forward.1} parent=0 // pred_fallthru
    _
  // Predicated region
  $region6: #{time2vec_forward.1} parent=0 // pred_check
    _
  $region7: #{time2vec_forward.1} parent=0 // pred_check_branch
    %13 = sbr.rel (0) target = $region9
  $region8: #{time2vec_forward.1} parent=0 // pred_region
    _
  $region9: #{time2vec_forward.1} parent=0 // pred_fallthru
    _
  // Predicated region
  $region10: #{time2vec_forward.1} parent=0 // pred_check
    _
  $region11: #{time2vec_forward.1} parent=0 // pred_check_branch
    %15 = sbr.rel (0) target = $region13
  $region12: #{time2vec_forward.1} parent=0 // pred_region
    _
  $region13: #{time2vec_forward.1} parent=0 // pred_fallthru
    _
  // Predicated region
  $region14: #{time2vec_forward.1} parent=0 // pred_check
    _
  $region15: #{time2vec_forward.1} parent=0 // pred_check_branch
    %17 = sbr.rel (0) target = $region17
  $region16: #{time2vec_forward.1} parent=0 // pred_region
    _
  $region17: #{time2vec_forward.1} parent=0 // pred_fallthru
    _
  // Predicated region
  $region18: #{time2vec_forward.1} parent=0 // pred_check
    _
  $region19: #{time2vec_forward.1} parent=0 // pred_check_branch
    %19 = sbr.rel (0) target = $region21
  $region20: #{time2vec_forward.1} parent=0 // pred_region
    _
  $region21: #{time2vec_forward.1} parent=0 // pred_fallthru
    _
  %v21 = vld [vmem:[%s0] sm:$0xff]
  %v22 = vld [vmem:[%s1] sm:$0xf]
  %v23 = vld [vmem:[%s1 + $0x4] sm:$0xf]
  %v24 = vpack.c.bf16 %v21, %v21
  %v25 = vunpack.c.l.bf16 %v24
  %v26 = vsub.f32 %v21, %v25
  %v27 = vpack.c.bf16 %v26, %v26
  %v28 = vunpack.c.l.bf16 %v27
  %v29 = vsub.f32 %v26, %v28
  %v30 = vpack.c.bf16 %v29, %v29
  %v33 = vunpack.c.l.b16 %v22
  %v34 = vunpack.c.l.b16 %v23
  %v35 = vpack.c.b16 %v34, %v33
  %vm37 = vcmask 130048
  %v39 = vsel %vm37, %v27, 0
  %41 = vmatprep.subr.bf16.mxu0 0
  %42 = vmatpush1.bf16.msra.mxu0 %v35
  %43 = vmatprep.subr.bf16.mxu0 0
  %44 = vmatpush1.bf16.msra.mxu0 0
  %45 = vmatprep.subr.bf16.mxu0 0
  %46 = vmatpush1.bf16.msra.mxu0 0
  %47 = vmatprep.subr.bf16.mxu0 0
  %48 = vmatpush1.bf16.msra.mxu0 0
  %49 = vmatprep.subr.bf16.mxu0 0
  %50 = vmatpush1.bf16.msra.mxu0 0
  %51 = vmatprep.subr.bf16.mxu0 0
  %52 = vmatpush1.bf16.msra.mxu0 0
  %53 = vmatprep.subr.bf16.mxu0 0
  %54 = vmatpush1.bf16.msra.mxu0 0
  %55 = vmatprep.subr.bf16.mxu0 0
  %56 = vmatpush1.bf16.msra.mxu0 0
  %57 = vmatprep.subr.bf16.mxu0 0
  %58 = vmatpush1.bf16.msra.mxu0 0
  %59 = vmatprep.subr.bf16.mxu0 0
  %60 = vmatpush1.bf16.msra.mxu0 0
  %61 = vmatprep.subr.bf16.mxu0 0
  %62 = vmatpush1.bf16.msra.mxu0 0
  %63 = vmatprep.subr.bf16.mxu0 0
  %64 = vmatpush1.bf16.msra.mxu0 0
  %65 = vmatprep.subr.bf16.mxu0 0
  %66 = vmatpush1.bf16.msra.mxu0 0
  %67 = vmatprep.subr.bf16.mxu0 0
  %68 = vmatpush1.bf16.msra.mxu0 0
  %69 = vmatprep.subr.bf16.mxu0 0
  %70 = vmatpush1.bf16.msra.mxu0 0
  %71 = vmatprep.subr.bf16.mxu0 0
  %72 = vmatpush1.bf16.msra.mxu0 0
  %73 = vmatprep.mubr.bf16.mxu0 0
  %74 = vmatmul.mubr.bf16.gmra.mrb[0].mxu0 %v39
  %v75 = vpop.f32.mrb[0].mxu0
  %v76 = vadd.f32 0.0, %v75
  %v77 = vpop.f32.mrb[0].mxu0
  %v78 = vpop.f32.mrb[0].mxu0
  %v79 = vpop.f32.mrb[0].mxu0
  %80 = vdwg.mxu0
  %v82 = vsel %vm37, %v24, 0
  %84 = vmatprep.subr.bf16.mxu0 0
  %85 = vmatpush1.bf16.msra.mxu0 %v35
  %86 = vmatprep.subr.bf16.mxu0 0
  %87 = vmatpush1.bf16.msra.mxu0 0
  %88 = vmatprep.subr.bf16.mxu0 0
  %89 = vmatpush1.bf16.msra.mxu0 0
  %90 = vmatprep.subr.bf16.mxu0 0
  %91 = vmatpush1.bf16.msra.mxu0 0
  %92 = vmatprep.subr.bf16.mxu0 0
  %93 = vmatpush1.bf16.msra.mxu0 0
  %94 = vmatprep.subr.bf16.mxu0 0
  %95 = vmatpush1.bf16.msra.mxu0 0
  %96 = vmatprep.subr.bf16.mxu0 0
  %97 = vmatpush1.bf16.msra.mxu0 0
  %98 = vmatprep.subr.bf16.mxu0 0
  %99 = vmatpush1.bf16.msra.mxu0 0
  %100 = vmatprep.subr.bf16.mxu0 0
  %101 = vmatpush1.bf16.msra.mxu0 0
  %102 = vmatprep.subr.bf16.mxu0 0
  %103 = vmatpush1.bf16.msra.mxu0 0
  %104 = vmatprep.subr.bf16.mxu0 0
  %105 = vmatpush1.bf16.msra.mxu0 0
  %106 = vmatprep.subr.bf16.mxu0 0
  %107 = vmatpush1.bf16.msra.mxu0 0
  %108 = vmatprep.subr.bf16.mxu0 0
  %109 = vmatpush1.bf16.msra.mxu0 0
  %110 = vmatprep.subr.bf16.mxu0 0
  %111 = vmatpush1.bf16.msra.mxu0 0
  %112 = vmatprep.subr.bf16.mxu0 0
  %113 = vmatpush1.bf16.msra.mxu0 0
  %114 = vmatprep.subr.bf16.mxu0 0
  %115 = vmatpush1.bf16.msra.mxu0 0
  %116 = vmatprep.mubr.bf16.mxu0 0
  %117 = vmatmul.mubr.bf16.gmra.mrb[0].mxu0 %v82
  %v118 = vpop.f32.mrb[0].mxu0
  %v119 = vadd.f32 %v76, %v118
  %v120 = vpop.f32.mrb[0].mxu0
  %v121 = vpop.f32.mrb[0].mxu0
  %v122 = vpop.f32.mrb[0].mxu0
  %123 = vdwg.mxu0
  %v125 = vsel %vm37, %v30, 0
  %127 = vmatprep.subr.bf16.mxu0 0
  %128 = vmatpush1.bf16.msra.mxu0 %v35
  %129 = vmatprep.subr.bf16.mxu0 0
  %130 = vmatpush1.bf16.msra.mxu0 0
  %131 = vmatprep.subr.bf16.mxu0 0
  %132 = vmatpush1.bf16.msra.mxu0 0
  %133 = vmatprep.subr.bf16.mxu0 0
  %134 = vmatpush1.bf16.msra.mxu0 0
  %135 = vmatprep.subr.bf16.mxu0 0
  %136 = vmatpush1.bf16.msra.mxu0 0
  %137 = vmatprep.subr.bf16.mxu0 0
  %138 = vmatpush1.bf16.msra.mxu0 0
  %139 = vmatprep.subr.bf16.mxu0 0
  %140 = vmatpush1.bf16.msra.mxu0 0
  %141 = vmatprep.subr.bf16.mxu0 0
  %142 = vmatpush1.bf16.msra.mxu0 0
  %143 = vmatprep.subr.bf16.mxu0 0
  %144 = vmatpush1.bf16.msra.mxu0 0
  %145 = vmatprep.subr.bf16.mxu0 0
  %146 = vmatpush1.bf16.msra.mxu0 0
  %147 = vmatprep.subr.bf16.mxu0 0
  %148 = vmatpush1.bf16.msra.mxu0 0
  %149 = vmatprep.subr.bf16.mxu0 0
  %150 = vmatpush1.bf16.msra.mxu0 0
  %151 = vmatprep.subr.bf16.mxu0 0
  %152 = vmatpush1.bf16.msra.mxu0 0
  %153 = vmatprep.subr.bf16.mxu0 0
  %154 = vmatpush1.bf16.msra.mxu0 0
  %155 = vmatprep.subr.bf16.mxu0 0
  %156 = vmatpush1.bf16.msra.mxu0 0
  %157 = vmatprep.subr.bf16.mxu0 0
  %158 = vmatpush1.bf16.msra.mxu0 0
  %159 = vmatprep.mubr.bf16.mxu0 0
  %160 = vmatmul.mubr.bf16.gmra.mrb[0].mxu0 %v125
  %v161 = vpop.f32.mrb[0].mxu0
  %v162 = vadd.f32 0.0, %v161
  %v163 = vpop.f32.mrb[0].mxu0
  %v164 = vpop.f32.mrb[0].mxu0
  %v165 = vpop.f32.mrb[0].mxu0
  %166 = vdwg.mxu0
  %v167 = vadd.f32 %v119, %v162
  %v168 = vld [vmem:[%s2] sm:$0x1]
  %v170 = vlaneseq
  %v171 = vshrl.u32 %v170, 7
  %v172 = vsub.s32 0, %v171
  %v173 = vrot.slane %v168, %v172
  %v175 = vmul.f32 %v167, %v173
  %v176 = vld [vmem:[%s3] sm:$0x1]
  %v178 = vlaneseq
  %v179 = vshrl.u32 %v178, 7
  %v180 = vsub.s32 0, %v179
  %v181 = vrot.slane %v176, %v180
  %v183 = vadd.f32 %v175, %v181
  %v184 = vand.u32 2147483647, %v183
  %vm185 = vcmp.le.f32.partialorder %v184, 0.7853982
  %vm186 = vcmp.lt.s32.totalorder %v183, 0
  %v187 = vand.u32 %v183, 2139095040
  %v188 = vshrl.u32 %v187, 23
  %v189 = vsub.s32 %v188, 127
  %v190 = vand.u32 2147483647, %v183
  %v191 = vand.u32 %v190, 8388607
  %v192 = vor.u32 %v191, 8388608
  %v193 = vsub.s32 0, %v192
  %v194 = vadd.s32 %v189, 1
  %vm195 = vcmp.gt.s32.totalorder %v194, 0
  %v196 = vsel %vm195, %v194, 0
  %v197 = vshrl.u32 %v196, 5
  %v198 = vand.u32 %v196, 31
  %v199 = vsub.s32 32, %v198
  %v200 = vshrl.u32 683565275, %v199
  %v201 = vshll.u32 683565275, %v198
  %v202 = vshrl.u32 2475754826, %v199
  %v203 = vor.u32 %v201, %v202
  %v204 = vshll.u32 2475754826, %v198
  %v205 = vshrl.u32 2131351028, %v199
  %v206 = vor.u32 %v204, %v205
  %v207 = vshll.u32 2131351028, %v198
  %v208 = vshrl.u32 2102212464, %v199
  %v209 = vor.u32 %v207, %v208
  %v210 = vshll.u32 2102212464, %v198
  %v211 = vshrl.u32 920167782, %v199
  %v212 = vor.u32 %v210, %v211
  %v213 = vshll.u32 920167782, %v198
  %v214 = vshrl.u32 1326507024, %v199
  %v215 = vor.u32 %v213, %v214
  %vm216 = vcmp.lt.s32.totalorder %v197, 1
  %vm217 = vcmp.lt.s32.totalorder %v197, 2
  %vm218 = vcmp.lt.s32.totalorder %v197, 3
  %vm219 = vcmp.lt.s32.totalorder %v197, 4
  %v220 = vsel %vm216, %v200, %v203
  %v221 = vsel %vm219, %v209, 2102212464
  %v222 = vsel %vm218, %v206, %v221
  %v223 = vsel %vm217, %v220, %v222
  %v224 = vsel %vm216, %v203, %v206
  %v225 = vsel %vm219, %v212, 920167782
  %v226 = vsel %vm218, %v209, %v225
  %v227 = vsel %vm217, %v224, %v226
  %v228 = vsel %vm216, %v206, %v209
  %v229 = vsel %vm219, %v215, 1326507024
  %v230 = vsel %vm218, %v212, %v229
  %v231 = vsel %vm217, %v228, %v230
  %v232 = vshll.u32 %v192, 8
  %v233 = vmul.u32.u64.compose %v232, %v231
  %v234 = vextract.low.u32 %v233
  %v235 = vextract.high.u32 %v233
  %v236 = vmul.u32.u64.compose %v232, %v227
  %v237 = vextract.low.u32 %v236
  %v238 = vextract.high.u32 %v236
  %v239 = vmul.u32 %v232, %v223
  %v240 = vadd.s32 %v235, %v237
  %vm241 = vc.u32 %v235, %v237
  %v242 = vadd.s32 %v238, 1
  %v243 = vsel %vm241, %v242, %v238
  %v244 = vadd.s32 %v239, %v243
  %v245 = vadd.s32 %v244, 536870912
  %v246 = vshrl.u32 %v245, 30
  %v247 = vshll.u32 %v246, 30
  %v248 = vsub.s32 %v244, %v247
  %vm249 = vcmp.lt.s32.totalorder %v248, 0
  %v250 = vsub.s32 0, %v248
  %v251 = vsel %vm249, %v250, %v248
  %v252 = vclz %v251
  %v253 = vsub.s32 %v252, 2
  %vm254 = vcmp.gt.s32.totalorder 0, %v253
  %v255 = vsel %vm254, 0, %v253
  %v256 = vsub.s32 32, %v255
  %v257 = vshll.u32 %v248, %v255
  %v258 = vshrl.u32 %v240, %v256
  %v259 = vor.u32 %v257, %v258
  %v260 = vsub.s32 4294967266, %v255
  %v261 = vadd.s32 %v260, 127
  %v262 = vshll.u32 %v261, 23
  %v263 = vor.u32 4788187, %v262
  %v264 = vand.u32 2147483647, %v263
  %v266 = vcvt.s32.f32 %v259
  %v267 = vmul.f32 %v266, %v264
  %v268 = vxor.u32 %v267, 2147483648
  %v269 = vsel %vm186, %v268, %v267
  %v270 = vsub.s32 4, %v246
  %v271 = vsel %vm186, %v270, %v246
  %v272 = vsel %vm185, %v183, %v269
  %v273 = vsel %vm185, 0, %v271
  %v274 = vcosq.f32.pop %v272
  %v275 = vsinq.f32.pop %v272
  %vm276 = vweird.f32 %v183
  %v277 = vadd.s32 %v273, 3
  %v278 = vand.u32 %v277, 3
  %vm279 = vcmp.lt.s32.totalorder %v278, 2
  %vm280 = vcmp.eq.s32.totalorder %v278, 0
  %v281 = vxor.u32 %v275, 2147483648
  %v282 = vsel %vm280, %v274, %v281
  %vm283 = vcmp.eq.s32.totalorder %v278, 2
  %v284 = vxor.u32 %v274, 2147483648
  %v285 = vsel %vm283, %v284, %v275
  %v286 = vsel %vm279, %v282, %v285
  %v287 = vsel %vm276, nan, %v286
  %v288 = vld [vmem:[%s4] sm:$0x1]
  %vm289 = vcmp.ne.f32.partialorder %v288, 0.0
  %v290 = vsel %vm289, 1, 0
  %v291 = vlaneseq
  %v292 = vshrl.u32 %v291, 7
  %v293 = vsub.s32 0, %v292
  %v294 = vrot.slane %v290, %v293
  %vm295 = vcmp.eq.s32.totalorder %v294, 1
  %v296 = vsel %vm295, %v167, %v287
  %297 = vst [vmem:[%s5] sm:$0xff] %v296
  // Predicated region
  $region22: #{time2vec_forward.1} parent=0 // pred_check
    _
  $region23: #{time2vec_forward.1} parent=0 // pred_check_branch
    %299 = sbr.rel (0) target = $region25
  $region24: #{time2vec_forward.1} parent=0 // pred_region
    _
  $region25: #{time2vec_forward.1} parent=0 // pred_fallthru
    _
  // Predicated region
  $region26: #{time2vec_forward.1} parent=0 // pred_check
    _
  $region27: #{time2vec_forward.1} parent=0 // pred_check_branch
    %301 = sbr.rel (0) target = $region29
  $region28: #{time2vec_forward.1} parent=0 // pred_region
    _
  $region29: #{time2vec_forward.1} parent=0 // pred_fallthru
    _

</llo_original>
